<compile_context>
chip_gen: v6e
topology: v6e:2x2x1
jax: 0.10.0
libtpu: 0.0.40
codegen_flags: <defaults>
</compile_context>

<pallas_src>
import jax
import jax.numpy as jnp
from jax.experimental import pallas as pl
from jax.experimental.pallas import tpu as pltpu


# ----------------------------------------------------------------------------
# Parameter init (faithful to the PyTorch __init__)
# ----------------------------------------------------------------------------
def make_position_embedding(content_len: int, embed_dim: int) -> jnp.ndarray:
    """Deterministic parameter init, identical to the PyTorch __init__.

    NOTE: faithfully reproduces the reference's asymmetric exponents:
      even cols: sin(pos / 10000^(i/D)),  odd cols: cos(pos / 10000^(2i/D)).
    This differs from "standard" sinusoidal PE on purpose.
    """
    assert embed_dim % 2 == 0, "embed_dim must be even (matches PyTorch module)"
    pos = jnp.arange(content_len, dtype=jnp.float32)[:, None]            # (L, 1)
    half = jnp.arange(0, embed_dim, 2, dtype=jnp.float32)                # (D/2,)
    suffix_even = 1.0 / (10000.0 ** (half / embed_dim))
    even = jnp.sin(pos * suffix_even)                                    # (L, D/2)
    suffix_odd = 1.0 / (10000.0 ** (2.0 * half / embed_dim))
    odd = jnp.cos(pos * suffix_odd)                                      # (L, D/2)
    pe = jnp.zeros((content_len, embed_dim), dtype=jnp.float32)
    pe = pe.at[:, 0::2].set(even)
    pe = pe.at[:, 1::2].set(odd)
    return pe


# ----------------------------------------------------------------------------
# Kernel
# ----------------------------------------------------------------------------
def _add_pe_kernel(x_ref, pe_ref, o_ref):
    # x_ref: (tb, tn) rows of the flattened (B, L*D) view.
    # pe_ref: (1, tn) matching chunk of the flattened positional table
    #         (broadcast over the sublane/batch axis by the VPU).
    o_ref[...] = x_ref[...] + pe_ref[...]


# ----------------------------------------------------------------------------
# Tile-size heuristics (generation-aware)
# ----------------------------------------------------------------------------
_LANE = 128


def _sublane_multiple(itemsize: int) -> int:
    # Native vreg sublane packing: f32 -> 8, bf16 -> 16, int8/fp8 -> 32.
    return {1: 32, 2: 16}.get(itemsize, 8)


def _vmem_budget_bytes() -> int:
    """Per-core VMEM budget for this kernel's pipeline buffers."""
    try:
        cap = pltpu.get_tpu_info().vmem_capacity_bytes  # 128 MiB v5e/v6e, 64 MiB v7x
    except Exception:
        cap = 64 << 20  # conservative fallback (v7x-sized)
    # Use at most half of physical VMEM; also never ask for more than 64 MiB.
    return int(min(cap // 2, 64 << 20))


def _choose_tiles(B: int, N: int, itemsize: int, budget: int):
    sub = _sublane_multiple(itemsize)
    # --- batch (sublane) tile: multiple of `sub`, or the full extent ---
    if B <= sub or B % sub != 0:
        tb = B
    else:
        tb = sub
        while tb * 2 <= min(B, 64) and B % (tb * 2) == 0:
            tb *= 2
    b_tiles = pl.cdiv(B, tb)

    # --- lane tile: as large as the VMEM budget allows, multiple of 128 ---
    if N < _LANE:
        # Only legal option below 128 lanes is the full extent (masked stores,
        # unavoidable for genuinely tiny rows).
        tn = N
    else:
        # Double-buffered x block + double-buffered out block are (tb, tn);
        # double-buffered pe block is (1, tn).  Keep ~25% headroom.
        bytes_per_col = (4 * tb + 2) * itemsize
        max_tn = max(_LANE, (budget * 3 // 4) // bytes_per_col)
        tn = min(pl.cdiv(N, _LANE) * _LANE, (max_tn // _LANE) * _LANE)
        tn = max(tn, _LANE)
        # v7x has 2 TensorCores: make sure the 'parallel' grid has >= 2 steps.
        if b_tiles * pl.cdiv(N, tn) < 2 and N >= 2 * _LANE:
            tn = pl.cdiv(pl.cdiv(N, 2), _LANE) * _LANE

    n_tiles = pl.cdiv(N, tn)
    return tb, tn, b_tiles, n_tiles


# ----------------------------------------------------------------------------
# Wrapper
# ----------------------------------------------------------------------------
def sin_position_embedding(x: jnp.ndarray, pe: jnp.ndarray) -> jnp.ndarray:
    """x: (B, L, D); pe: (L, D). Returns x + pe[None] via a Pallas TPU kernel."""
    B, L, D = x.shape
    assert pe.shape == (L, D)
    pe = pe.astype(x.dtype)

    # Lane-dense flatten: (B, L, D) -> (B, N).  Elementwise add is
    # layout-agnostic, and N = L*D is usually a multiple of 128 -> unmasked
    # vector stores; any ragged tail is handled by the cdiv grid below.
    N = L * D
    x2 = x.reshape(B, N)
    pe2 = pe.reshape(1, N)

    itemsize = jnp.dtype(x.dtype).itemsize
    budget = _vmem_budget_bytes()
    tb, tn, b_tiles, n_tiles = _choose_tiles(B, N, itemsize, budget)

    # Grid: lane axis OUTER, batch axis INNER.  pe's block index (0, j) is
    # constant across the inner batch loop, so Pallas fetches each pe chunk
    # from HBM exactly once.
    grid = (n_tiles, b_tiles)

    cost = pl.CostEstimate(
        flops=B * N,
        transcendentals=0,
        bytes_accessed=2 * B * N * itemsize + N * itemsize,
    )

    out2 = pl.pallas_call(
        _add_pe_kernel,
        out_shape=jax.ShapeDtypeStruct((B, N), x.dtype),
        grid_spec=pltpu.PrefetchScalarGridSpec(
            num_scalar_prefetch=0,
            grid=grid,
            in_specs=[
                pl.BlockSpec((tb, tn), lambda j, i: (i, j)),
                pl.BlockSpec((1, tn), lambda j, i: (0, j)),
            ],
            out_specs=pl.BlockSpec((tb, tn), lambda j, i: (i, j)),
        ),
        compiler_params=pltpu.CompilerParams(
            dimension_semantics=("parallel", "parallel"),
            vmem_limit_bytes=budget,
        ),
        cost_estimate=cost,
        input_output_aliases={0: 0},
    )(x2, pe2)
    return out2.reshape(B, L, D)


if __name__ == "__main__":
    content_len = 16
    embed_dim = 64
    batch = 2

    key = jax.random.PRNGKey(0)
    x = jax.random.normal(key, (batch, content_len, embed_dim), dtype=jnp.float32)
    pe = make_position_embedding(content_len, embed_dim)

    # Compute the reference BEFORE the kernel call (kernel may alias x's buffer).
    ref = x + pe[None, :, :]

    out = sin_position_embedding(x, pe)
    out = jax.block_until_ready(out)

    assert out.shape == (batch, content_len, embed_dim)
    assert out.dtype == x.dtype
    assert jnp.allclose(out, ref, atol=1e-6), "mismatch vs reference"

    print("KERNEL_OK")
</pallas_src>

<mosaic_0001>
module attributes {stable_mosaic.version = 11 : i64} {
  func.func @_add_pe_kernel(%arg0: i32, %arg1: i32, %arg2: memref<2x512xf32, #tpu.memory_space<vmem>>, %arg3: memref<1x512xf32, #tpu.memory_space<vmem>>, %arg4: memref<2x512xf32, #tpu.memory_space<vmem>>) attributes {dimension_semantics = [#tpu.dimension_semantics<parallel>, #tpu.dimension_semantics<parallel>], iteration_bounds = array<i64: 2, 1>, scalar_prefetch = 0 : i64, scratch_operands = 0 : i64, tpu.core_type = #tpu.core_type<tc>, window_params = [{transform_indices = @transform_0, window_bounds = array<i64: 2, 512>}, {transform_indices = @transform_1, window_bounds = array<i64: 1, 512>}, {transform_indices = @transform_2, window_bounds = array<i64: 2, 512>}]} {
    %c0 = arith.constant 0 : index
    %c0_0 = arith.constant 0 : index
    %0 = vector.load %arg2[%c0, %c0_0] : memref<2x512xf32, #tpu.memory_space<vmem>>, vector<2x512xf32>
    %c0_1 = arith.constant 0 : index
    %c0_2 = arith.constant 0 : index
    %1 = vector.load %arg3[%c0_1, %c0_2] : memref<1x512xf32, #tpu.memory_space<vmem>>, vector<1x512xf32>
    %2 = vector.broadcast %1 : vector<1x512xf32> to vector<2x512xf32>
    %3 = arith.addf %0, %2 : vector<2x512xf32>
    %c0_3 = arith.constant 0 : index
    %c0_4 = arith.constant 0 : index
    %4 = vector.load %arg4[%c0_3, %c0_4] : memref<2x512xf32, #tpu.memory_space<vmem>>, vector<2x512xf32>
    tpu.vector_store %arg4[%c0_3, %c0_4], %3 {strides = array<i32>} : memref<2x512xf32, #tpu.memory_space<vmem>>, vector<2x512xf32>,
    return
  }
  func.func @transform_0(%arg0: i32, %arg1: i32) -> (i32, i32) {
    %c0_i32 = arith.constant 0 : i32
    return %arg1, %arg0 : i32, i32
  }
  func.func @transform_1(%arg0: i32, %arg1: i32) -> (i32, i32) {
    %c0_i32 = arith.constant 0 : i32
    %c0_i32_0 = arith.constant 0 : i32
    return %c0_i32, %arg0 : i32, i32
  }
  func.func @transform_2(%arg0: i32, %arg1: i32) -> (i32, i32) {
    %c0_i32 = arith.constant 0 : i32
    return %arg1, %arg0 : i32, i32
  }
}

</mosaic_0001>

<llo_original>
// kernel: tpu_custom_call.1
$region0: #{tpu_custom_call.1}
  #allocation0 [shape = 'u32[]', space=smem, size = 0x4, offset = 0x4, fixed_abs, tag = 'smem constant byte address 0x4 - core index']
  #allocation1 [shape = 'u32[144,128]{1,0:T(1,128)}', space=vmem, size = 0x12000, scoped, tag = 'internal scratch']
  %s0 = inlined_call_operand.hbm [shape: f32[2,1024], index: 0, kind: input, shape index: {}, may-alias: {0,2}]
  %s1 = inlined_call_operand.vmem [shape: f32[1,1024], index: 1, kind: input, shape index: {}]
  %s2 = inlined_call_operand.hbm [shape: f32[2,1024], index: 2, kind: output, shape index: {}, may-alias: {0,2}]
  %s3 = sld [smem:[#allocation0]]
  $region45: #{tpu_custom_call.1} parent=0
    _
  %s5 = ssub.s32 1, %s3
  %s6 = scalar_select 0, %s5, %s3
  $region1: #{tpu_custom_call.1} parent=0
    #allocation2 [shape = 'u8[8192]{0}', space=vmem, size = 0x2000, scoped, tag = 'input window, operand 0']
    #allocation3 [shape = 's32[2]{0}', space=sflag, size = 0x8, scoped, tag = 'scoped memory for tpu_custom_call.1']
    #allocation4 [shape = 's32[2]{0}', space=sflag, size = 0x8, scoped, tag = 'scoped memory for tpu_custom_call.1']
    #allocation5 [shape = 'u8[8192]{0}', space=vmem, size = 0x2000, scoped, tag = 'output window, operand 0']
    %7 = vsyncpa [#allocation3], 0
    %s8 = scalar_lea.sflag [#allocation3], 1
    %9 = vsyncpa %s8, 0
    %10 = vsyncpa [#allocation4], 0
    %s11 = scalar_lea.sflag [#allocation4], 1
    %12 = vsyncpa %s11, 0
    loop: start=0, step=1, limit=4
    $region2: #{tpu_custom_call.1} parent=1 // loop_pre_header
      _
    $region3: #{tpu_custom_call.1} parent=1 // loop_header
      %s14 = sphi 0, %s18
      %p15 = scmp.ge.s32.totalorder %s14, 4
      %s21 = sphi 0, %s33
      %s22 = sphi 0, %s29
      %s23 = sphi 0, %s21
      %s24 = sphi 0, %s22
      %s25 = sphi 0, %s23
      %s26 = sphi 0, %s24
      %s38 = sphi 0, %s40
      %s41 = sphi 0, %s38
      %s42 = sphi 0, %s41
      %s58 = sphi 0, %s42
      %s64 = sphi 0, %s66
      %s67 = sphi 0, %s64
      %s68 = sphi 0, %s67
      %s84 = sphi 0, %s68
      %s92 = sphi 0, %s94
      %s95 = sphi 0, %s92
      %s96 = sphi 0, %s95
      %s112 = sphi 0, %s96
    $region4: #{tpu_custom_call.1} parent=1 // loop_header_branch
      %17 = sbr.rel (%p15) target = $region8
    $region5: #{tpu_custom_call.1} parent=1 // loop_body
      %s19 = ssub.s32 %s14, 1
      %s20 = ssub.s32 %s14, 2
      %s27 = sadd.s32 1, %s22
      %p28 = scmp.ge.s32.totalorder %s27, 1
      %s29 = scalar_select %p28, 0, %s27
      %s30 = sadd.s32 1, %s21
      %s31 = scalar_select %p28, %s30, %s21
      %p32 = scmp.ge.s32.totalorder %s31, 2
      %s33 = scalar_select %p32, 0, %s31
      %s34 = ssub.s32 %s22, %s29
      %s35 = ssub.s32 %s21, %s33
      %s36 = sor.u32 %s34, %s35
      %p37 = scmp.eq.s32.totalorder %s36, 0
      %s39 = sadd.s32 %s38, 1
      %s40 = scalar_select %p37, %s38, %s39
      %p43 = pneg %p37
      %p44 = scmp.eq.s32.totalorder %s14, 1
      %p45 = por %p43, %p44
      %p46 = scmp.ne.s32.totalorder %s38, %s41
      %p47 = scmp.eq.s32.totalorder %s14, 0
      %p48 = por %p46, %p47
      %p49 = scmp.ne.s32.totalorder %s38, %s41
      %p50 = scmp.eq.s32.totalorder %s19, 1
      %p51 = por %p49, %p50
      %p52 = scmp.ne.s32.totalorder %s41, %s42
      %p53 = scmp.eq.s32.totalorder %s19, 0
      %p54 = por %p52, %p53
      %p55 = scmp.ne.s32.totalorder %s41, %s42
      %p56 = scmp.eq.s32.totalorder %s20, 1
      %p57 = por %p55, %p56
      %p59 = scmp.ne.s32.totalorder %s42, %s58
      %p60 = scmp.eq.s32.totalorder %s20, 0
      %p61 = por %p59, %p60
      %s62 = ssub.s32 %s21, %s33
      %p63 = scmp.eq.s32.totalorder %s62, 0
      %s65 = sadd.s32 %s64, 1
      %s66 = scalar_select %p63, %s64, %s65
      %p69 = pneg %p63
      %p70 = scmp.eq.s32.totalorder %s14, 1
      %p71 = por %p69, %p70
      %p72 = scmp.ne.s32.totalorder %s64, %s67
      %p73 = scmp.eq.s32.totalorder %s14, 0
      %p74 = por %p72, %p73
      %p75 = scmp.ne.s32.totalorder %s64, %s67
      %p76 = scmp.eq.s32.totalorder %s19, 1
      %p77 = por %p75, %p76
      %p78 = scmp.ne.s32.totalorder %s67, %s68
      %p79 = scmp.eq.s32.totalorder %s19, 0
      %p80 = por %p78, %p79
      %p81 = scmp.ne.s32.totalorder %s67, %s68
      %p82 = scmp.eq.s32.totalorder %s20, 1
      %p83 = por %p81, %p82
      %p85 = scmp.ne.s32.totalorder %s68, %s84
      %p86 = scmp.eq.s32.totalorder %s20, 0
      %p87 = por %p85, %p86
      %s88 = ssub.s32 %s22, %s29
      %s89 = ssub.s32 %s21, %s33
      %s90 = sor.u32 %s88, %s89
      %p91 = scmp.eq.s32.totalorder %s90, 0
      %s93 = sadd.s32 %s92, 1
      %s94 = scalar_select %p91, %s92, %s93
      %p97 = pneg %p91
      %p98 = scmp.eq.s32.totalorder %s14, 1
      %p99 = por %p97, %p98
      %p100 = scmp.ne.s32.totalorder %s92, %s95
      %p101 = scmp.eq.s32.totalorder %s14, 0
      %p102 = por %p100, %p101
      %p103 = scmp.ne.s32.totalorder %s92, %s95
      %p104 = scmp.eq.s32.totalorder %s19, 1
      %p105 = por %p103, %p104
      %p106 = scmp.ne.s32.totalorder %s95, %s96
      %p107 = scmp.eq.s32.totalorder %s19, 0
      %p108 = por %p106, %p107
      %p109 = scmp.ne.s32.totalorder %s95, %s96
      %p110 = scmp.eq.s32.totalorder %s20, 1
      %p111 = por %p109, %p110
      %p113 = scmp.ne.s32.totalorder %s96, %s112
      %p114 = scmp.eq.s32.totalorder %s20, 0
      %p115 = por %p113, %p114
      %p116 = scmp.le.s32.totalorder 1, %s14
      %p117 = scmp.lt.s32.totalorder %s14, 3
      %p118 = pnand %p116, %p117
      %p119 = pneg %p118
      // Predicated region
      $region9: #{tpu_custom_call.1} parent=5 // pred_check
        _
      $region10: #{tpu_custom_call.1} parent=5 // pred_check_branch
        %121 = sbr.rel (%p118) target = $region12
      $region11: #{tpu_custom_call.1} parent=5 // pred_region
        %s122 = ssub.s32 %s14, 1
      $region12: #{tpu_custom_call.1} parent=5 // pred_fallthru
        _
      %p123 = scmp.lt.s32.totalorder %s14, 2
      // Predicated region
      $region13: #{tpu_custom_call.1} parent=5 // pred_check
        %p124 = pneg %p123
      $region14: #{tpu_custom_call.1} parent=5 // pred_check_branch
        %126 = sbr.rel (%p124) target = $region16
      $region15: #{tpu_custom_call.1} parent=5 // pred_region
        // Predicated region
        $region17: #{tpu_custom_call.1} parent=15 // pred_check
          %p127 = pneg %p48
        $region18: #{tpu_custom_call.1} parent=15 // pred_check_branch
          %129 = sbr.rel (%p127) target = $region20
        $region19: #{tpu_custom_call.1} parent=15 // pred_region
          %s130 = sand.u32 %s38, 1
          %s131 = scalar_lea.sflag [#allocation3], %s130
          %s132 = sand.u32 %s38, 1
          %s133 = smul.addr %s132, 8
          %s134 = scalar_lea.vmem [#allocation2], %s133
          %s135 = smul.u32 4, %s21
          %s137 = ssub.s32 128, 128
          %138 = vsyncadd %s131, %s137
          %s139 = smul.addr %s22, 8
          %s140 = sadd.s32 %s135, %s139
          %s141 = smul.addr %s140, 32
          %s142 = scalar_lea.hbm %s0, %s141
          %s144 = sshll.u32 %s134, 4
          %s145 = int_to_ptr.vmem [resolvable:$true] %s144
          %147 = dma.hbm_to_vmem [thread:$0]  %s142, 128, %s145, %s131
        $region20: #{tpu_custom_call.1} parent=15 // pred_fallthru
          _
        // Predicated region
        $region21: #{tpu_custom_call.1} parent=15 // pred_check
          %p148 = pneg %p74
        $region22: #{tpu_custom_call.1} parent=15 // pred_check_branch
          %150 = sbr.rel (%p148) target = $region24
        $region23: #{tpu_custom_call.1} parent=15 // pred_region
          %s151 = smul.u32 4, %s21
          %p152 = scmp.lt.s32.totalorder %s151, 7
          %s153 = scalar_select %p152, %s151, 7
          %s154 = scalar_lea.vmem %s1, %s153
          %s155 = smul.u32 4, %s21
        $region24: #{tpu_custom_call.1} parent=15 // pred_fallthru
          _
      $region16: #{tpu_custom_call.1} parent=5 // pred_fallthru
        _
      %p156 = scmp.le.s32.totalorder 1, %s14
      %p157 = scmp.lt.s32.totalorder %s14, 3
      %p158 = pnand %p156, %p157
      %p159 = pneg %p158
      // Predicated region
      $region25: #{tpu_custom_call.1} parent=5 // pred_check
        _
      $region26: #{tpu_custom_call.1} parent=5 // pred_check_branch
        %161 = sbr.rel (%p158) target = $region28
      $region27: #{tpu_custom_call.1} parent=5 // pred_region
        %s162 = ssub.s32 %s14, 1
        %s163 = sand.u32 %s41, 1
        %s164 = scalar_lea.sflag [#allocation3], %s163
        %s165 = sand.u32 %s41, 1
        %s166 = smul.addr %s165, 8
        %s167 = scalar_lea.vmem [#allocation2], %s166
        // Predicated region
        $region29: #{tpu_custom_call.1} parent=27 // pred_check
          %p168 = pneg %p54
        $region30: #{tpu_custom_call.1} parent=27 // pred_check_branch
          %170 = sbr.rel (%p168) target = $region32
        $region31: #{tpu_custom_call.1} parent=27 // pred_region
          %171 = dma.done %s164, 128
        $region32: #{tpu_custom_call.1} parent=27 // pred_fallthru
          _
        %s172 = sand.u32 %s41, 1
        %s173 = scalar_lea.sflag [#allocation3], %s172
        %s174 = sand.u32 %s41, 1
        %s175 = smul.addr %s174, 8
        %s176 = scalar_lea.vmem [#allocation2], %s175
        %p177 = pneg %p54
        %p178 = pneg %p51
        %s179 = smul.u32 4, %s23
        %p180 = scmp.lt.s32.totalorder %s179, 7
        %s181 = scalar_select %p180, %s179, 7
        %s182 = scalar_lea.vmem %s1, %s181
        %p183 = pneg %p80
        %p184 = pneg %p77
        %p185 = pneg %p108
        %p186 = pneg %p105
        %s187 = sand.u32 %s95, 1
        %s188 = scalar_lea.sflag [#allocation4], %s187
        %s189 = sand.u32 %s95, 1
        %s190 = smul.addr %s189, 8
        %s191 = scalar_lea.vmem [#allocation5], %s190
        %s192 = smul.u32 4, %s23
        %s193 = smul.u32 4, %s23
        %p194 = scmp.lt.s32.totalorder %s193, 7
        %s195 = scalar_select %p194, %s193, 7
        %s196 = scalar_lea.vmem %s1, %s195
        %s197 = smul.u32 4, %s23
        %s198 = smul.u32 4, %s23
        %v199 = vld [vmem:[%s167] sm:$0xff]
        %v200 = vld [vmem:[%s196] sm:$0xf]
        %v202 = vlaneseq
        %v203 = vshrl.u32 %v202, 7
        %v204 = vsub.s32 0, %v203
        %v205 = vrot.slane %v200, %v204
        %v206 = vlaneseq
        %v207 = vshrl.u32 %v206, 7
        %v208 = vsub.s32 1, %v207
        %v209 = vrot.slane %v200, %v208
        %v210 = vlaneseq
        %v211 = vshrl.u32 %v210, 7
        %v212 = vsub.s32 2, %v211
        %v213 = vrot.slane %v200, %v212
        %v214 = vlaneseq
        %v215 = vshrl.u32 %v214, 7
        %v216 = vsub.s32 3, %v215
        %v217 = vrot.slane %v200, %v216
        %v218 = vcombine.low %v205, %v209
        %v219 = vcombine.low %v213, %v217
        %v221 = vunpack.c.l.s4 1983009808
        %v222 = vunpack.c.0.s8 %v221
        %v223 = vlaneseq
        %v224 = vshrl.u32 %v223, 7
        %v225 = vsub.s32 %v222, %v224
        %v226 = vrot.slane %v218, %v225
        %v228 = vunpack.c.l.s4 1983009808
        %v229 = vunpack.c.0.s8 %v228
        %v230 = vlaneseq
        %v231 = vshrl.u32 %v230, 7
        %v232 = vsub.s32 %v229, %v231
        %v233 = vrot.slane %v219, %v232
        %v234 = vcombine.low %v226, %v233
        %v236 = vadd.f32 %v199, %v234
        %237 = vst [vmem:[%s191] sm:$0xff] %v236
        %s238 = sand.u32 %s95, 1
        %s239 = scalar_lea.sflag [#allocation4], %s238
        %s240 = sand.u32 %s95, 1
        %s241 = smul.addr %s240, 8
        %s242 = scalar_lea.vmem [#allocation5], %s241
        // Predicated region
        $region33: #{tpu_custom_call.1} parent=27 // pred_check
          %p243 = pneg %p105
        $region34: #{tpu_custom_call.1} parent=27 // pred_check_branch
          %245 = sbr.rel (%p243) target = $region36
        $region35: #{tpu_custom_call.1} parent=27 // pred_region
          %s246 = smul.u32 4, %s23
          %s248 = ssub.s32 128, 128
          %249 = vsyncadd %s239, %s248
          %s250 = smul.addr %s24, 8
          %s251 = sadd.s32 %s246, %s250
          %s252 = smul.addr %s251, 32
          %s253 = scalar_lea.hbm %s2, %s252
          %s255 = sshll.u32 %s242, 4
          %s256 = int_to_ptr.vmem [resolvable:$true] %s255
          %258 = dma.vmem_to_hbm [thread:$0]  %s256, 128, %s253, %s239
        $region36: #{tpu_custom_call.1} parent=27 // pred_fallthru
          _
      $region28: #{tpu_custom_call.1} parent=5 // pred_fallthru
        _
      %p259 = scmp.le.s32.totalorder 2, %s14
      // Predicated region
      $region37: #{tpu_custom_call.1} parent=5 // pred_check
        %p260 = pneg %p259
      $region38: #{tpu_custom_call.1} parent=5 // pred_check_branch
        %262 = sbr.rel (%p260) target = $region40
      $region39: #{tpu_custom_call.1} parent=5 // pred_region
        %s263 = ssub.s32 %s14, 2
        // Predicated region
        $region41: #{tpu_custom_call.1} parent=39 // pred_check
          %p264 = pneg %p111
        $region42: #{tpu_custom_call.1} parent=39 // pred_check_branch
          %266 = sbr.rel (%p264) target = $region44
        $region43: #{tpu_custom_call.1} parent=39 // pred_region
          %s267 = sand.u32 %s96, 1
          %s268 = scalar_lea.sflag [#allocation4], %s267
          %s269 = sand.u32 %s96, 1
          %s270 = smul.addr %s269, 8
          %s271 = scalar_lea.vmem [#allocation5], %s270
          %272 = dma.done %s268, 128
        $region44: #{tpu_custom_call.1} parent=39 // pred_fallthru
          _
      $region40: #{tpu_custom_call.1} parent=5 // pred_fallthru
        _
    $region6: #{tpu_custom_call.1} parent=1 // loop_footer
      %s18 = sadd.s32 1, %s14
    $region7: #{tpu_custom_call.1} parent=1 // loop_footer_branch
      %13 = sbr.rel target = $region3
    $region8: #{tpu_custom_call.1} parent=1 // loop_exit
      _
    %273 = vsyncpa [#allocation3], 1
    %s274 = scalar_lea.sflag [#allocation3], 1
    %275 = vsyncpa %s274, 1
    %276 = vsyncpa [#allocation4], 1
    %s277 = scalar_lea.sflag [#allocation4], 1
    %278 = vsyncpa %s277, 1

</llo_original>
